<compile_context>
chip_gen: v6e
topology: v6e:2x2x1
jax: 0.10.0
libtpu: 0.0.40
codegen_flags: <defaults>
</compile_context>

<pallas_src>
import functools

import jax
import jax.numpy as jnp
from jax.experimental import pallas as pl
from jax.experimental.pallas import tpu as pltpu

NEURONS = 10
NUM_OF_LAYERS = 10

FP = 128   # lane-padded feature width used inside the kernel / weight pack
LB = 16    # sublane-padded layer count for the packed bias array


def _round_up(x, m):
    return ((x + m - 1) // m) * m


def _mlp_kernel(num_layers, obs_length, act_length,
                x_ref, w_ref, b_ref, out_ref, xpad_ref):
    """Fused MLP over one batch tile.

    x_ref:    (BT, obs_length)     bf16 activations (unpadded lanes)
    w_ref:    (num_layers, FP, FP) bf16 packed weights (in, out) per layer
    b_ref:    (LB, FP)             f32 packed biases (row i = layer i)
    out_ref:  (BT, act_length)     f32 output (narrow writeback)
    xpad_ref: (BT, FP)             bf16 VMEM scratch for the lane-padded input
    """
    # Lane-pad the activation tile to 128 inside VMEM.  Padded lanes must be
    # exactly zero so they contribute nothing through the zero-padded weights.
    if obs_length == FP:
        h_in = x_ref[...]
    else:
        xpad_ref[...] = jnp.zeros_like(xpad_ref)
        xpad_ref[:, :obs_length] = x_ref[...]
        h_in = xpad_ref[...]

    # Layer 0: input is already bf16 -> straight to the MXU, f32 accumulate.
    h = jnp.dot(h_in, w_ref[0], preferred_element_type=jnp.float32)
    h = h + b_ref[0:1, :]                                  # f32 bias add (VPU)

    # Layers 1..L-1: ReLU on the previous output, bf16 matmul, f32 bias.
    for i in range(1, num_layers):                         # static unroll
        h = jnp.maximum(h, 0.0)                            # ReLU (hidden only)
        h = jnp.dot(h.astype(jnp.bfloat16), w_ref[i],
                    preferred_element_type=jnp.float32)
        h = h + b_ref[i:i + 1, :]

    # Narrow store: only the real act_length lanes go back to HBM.
    out_ref[...] = h[:, :act_length].astype(out_ref.dtype)


@functools.partial(jax.jit, static_argnames=("act_length", "batch_tile"))
def _forward_impl(obs, w_packed, b_packed, act_length, batch_tile):
    num_layers = w_packed.shape[0]
    B, obs_length = obs.shape
    assert obs_length <= FP, f"obs_length={obs_length} must be <= {FP}"
    assert act_length <= FP, f"act_length={act_length} must be <= {FP}"
    assert num_layers <= LB, f"num_layers={num_layers} must be <= {LB}"

    n_tiles = pl.cdiv(B, batch_tile)
    B_pad = n_tiles * batch_tile

    # Cast once to bf16 (matmul operand dtype) -> half-width input DMA.
    x = obs.astype(jnp.bfloat16)
    # Row-pad to a tile multiple only when needed; no lane padding on host.
    if B_pad != B:
        x = jnp.zeros((B_pad, obs_length), jnp.bfloat16).at[:B].set(x)

    kernel = functools.partial(_mlp_kernel, num_layers, obs_length, act_length)

    out_p = pl.pallas_call(
        kernel,
        out_shape=jax.ShapeDtypeStruct((B_pad, act_length), jnp.float32),
        grid=(n_tiles,),
        in_specs=[
            pl.BlockSpec((batch_tile, obs_length), lambda i: (i, 0)),  # x tile
            pl.BlockSpec((num_layers, FP, FP), lambda i: (0, 0, 0)),   # W pack (resident)
            pl.BlockSpec((LB, FP), lambda i: (0, 0)),                  # b pack (resident)
        ],
        out_specs=pl.BlockSpec((batch_tile, act_length), lambda i: (i, 0)),
        scratch_shapes=[pltpu.VMEM((batch_tile, FP), jnp.bfloat16)],
        compiler_params=pltpu.CompilerParams(
            dimension_semantics=("parallel",)),   # shard batch tiles across TCs (v7x)
    )(x, w_packed, b_packed)

    return out_p if B_pad == B else out_p[:B]


def _choose_batch_tile(batch):
    if batch <= 8:
        return 8
    # >= 2 tiles for large batches (so the "parallel" axis can use both v7x
    # TensorCores), multiple of 16 (bf16 sublane tiling), capped at 1024 rows
    # (~0.5 MiB bf16 per x tile; VMEM is not a constraint here).
    return min(1024, _round_up(pl.cdiv(batch, 2), 16))


def linear_policy_forward(obs, w_packed, b_packed, act_length, batch_tile=None):
    """obs: [B, obs_length] f32. w_packed: (L,128,128) bf16. b_packed: (16,128) f32."""
    if batch_tile is None:
        batch_tile = _choose_batch_tile(obs.shape[0])
    return _forward_impl(obs, w_packed, b_packed, act_length, batch_tile)


def init_params(obs_length, act_length, key):
    """Deterministic parameter init matching nn.Linear shapes (pre-transposed to (in, out))."""
    sizes = []
    in_size = obs_length
    if NUM_OF_LAYERS == 1:
        sizes.append((in_size, act_length))
    else:
        for _ in range(NUM_OF_LAYERS - 1):
            sizes.append((in_size, NEURONS))
            in_size = NEURONS
        sizes.append((in_size, act_length))

    weights, biases = [], []
    for (fan_in, fan_out) in sizes:
        key, wk, bk = jax.random.split(key, 3)
        bound = 1.0 / jnp.sqrt(fan_in)
        w = jax.random.uniform(wk, (fan_in, fan_out), jnp.float32, -bound, bound)
        b = jax.random.uniform(bk, (fan_out,), jnp.float32, -bound, bound)
        weights.append(w)
        biases.append(b)
    return weights, biases


def pack_params(weights, biases):
    """One-time (amortized) packing: pad & stack all layers into 2 arrays."""
    num_layers = len(weights)
    assert num_layers <= LB, f"num_layers={num_layers} must be <= {LB}"
    w_packed = jnp.zeros((num_layers, FP, FP), jnp.bfloat16)
    b_packed = jnp.zeros((LB, FP), jnp.float32)
    for i, (w, b) in enumerate(zip(weights, biases)):
        fan_in, fan_out = w.shape
        assert fan_in <= FP and fan_out <= FP, (fan_in, fan_out)
        assert b.shape[0] == fan_out
        w_packed = w_packed.at[i, :fan_in, :fan_out].set(w.astype(jnp.bfloat16))
        b_packed = b_packed.at[i, :fan_out].set(b)
    return jax.device_put(w_packed), jax.device_put(b_packed)


def reference_forward_bf16(obs, weights, biases):
    """Same math as the kernel (bf16 matmul operands, f32 accumulate/elementwise)."""
    h = obs.astype(jnp.float32)
    for i, (w, b) in enumerate(zip(weights, biases)):
        h = jnp.dot(h.astype(jnp.bfloat16), w.astype(jnp.bfloat16),
                    preferred_element_type=jnp.float32) + b
        if i < len(weights) - 1:
            h = jnp.maximum(h, 0.0)
    return h


def reference_forward_f32(obs, weights, biases):
    h = obs
    for i, (w, b) in enumerate(zip(weights, biases)):
        h = h @ w + b
        if i < len(weights) - 1:
            h = jnp.maximum(h, 0.0)
    return h


if __name__ == "__main__":
    obs_length = 16
    act_length = 4
    batch = 2

    key = jax.random.PRNGKey(0)
    key, obs_key = jax.random.split(key)
    obs = jax.random.normal(obs_key, (batch, obs_length), jnp.float32)

    weights, biases = init_params(obs_length, act_length, key)
    w_packed, b_packed = pack_params(weights, biases)   # amortized, not per-call

    out = linear_policy_forward(obs, w_packed, b_packed, act_length)
    out = jax.block_until_ready(out)
    assert out.shape == (batch, act_length), out.shape

    # Exact-semantics check against a bf16-consistent reference.
    ref = reference_forward_bf16(obs, weights, biases)
    assert jnp.allclose(out, ref, atol=2e-3, rtol=2e-3), (out, ref)

    # Loose sanity check against full-f32 math (bf16 rounding over 10 layers).
    ref_f32 = reference_forward_f32(obs, weights, biases)
    assert jnp.allclose(out, ref_f32, atol=1e-1, rtol=1e-1), (out, ref_f32)

    print("KERNEL_OK")
</pallas_src>

<mosaic_0001>
module attributes {stable_mosaic.version = 11 : i64} {
  func.func @_mlp_kernel(%arg0: i32, %arg1: memref<8x16xbf16, #tpu.memory_space<vmem>>, %arg2: memref<10x128x128xbf16, #tpu.memory_space<vmem>>, %arg3: memref<16x128xf32, #tpu.memory_space<vmem>>, %arg4: memref<8x4xf32, #tpu.memory_space<vmem>>, %arg5: memref<8x128xbf16, #tpu.memory_space<vmem>>) attributes {dimension_semantics = [#tpu.dimension_semantics<parallel>], iteration_bounds = array<i64: 1>, scalar_prefetch = 0 : i64, scratch_operands = 1 : i64, tpu.core_type = #tpu.core_type<tc>, window_params = [{transform_indices = @transform_0, window_bounds = array<i64: 8, 16>}, {pipeline_mode = #tpu.pipeline_mode<synchronous>, transform_indices = @transform_1, window_bounds = array<i64: 10, 128, 128>}, {pipeline_mode = #tpu.pipeline_mode<synchronous>, transform_indices = @transform_2, window_bounds = array<i64: 16, 128>}, {transform_indices = @transform_3, window_bounds = array<i64: 8, 4>}]} {
    %cst = arith.constant 0.000000e+00 : bf16
    %0 = vector.broadcast %cst : bf16 to vector<8x128xbf16>
    %c0 = arith.constant 0 : index
    %c0_0 = arith.constant 0 : index
    %1 = vector.load %arg5[%c0, %c0_0] : memref<8x128xbf16, #tpu.memory_space<vmem>>, vector<8x128xbf16>
    tpu.vector_store %arg5[%c0, %c0_0], %0 {strides = array<i32>} : memref<8x128xbf16, #tpu.memory_space<vmem>>, vector<8x128xbf16>,
    %c0_1 = arith.constant 0 : index
    %c0_2 = arith.constant 0 : index
    %2 = vector.load %arg1[%c0_1, %c0_2] : memref<8x16xbf16, #tpu.memory_space<vmem>>, vector<8x16xbf16>
    %c0_3 = arith.constant 0 : index
    %c0_4 = arith.constant 0 : index
    %3 = vector.load %arg5[%c0_3, %c0_4] : memref<8x128xbf16, #tpu.memory_space<vmem>>, vector<8x16xbf16>
    tpu.vector_store %arg5[%c0_3, %c0_4], %2 {strides = array<i32>} : memref<8x128xbf16, #tpu.memory_space<vmem>>, vector<8x16xbf16>,
    %c0_5 = arith.constant 0 : index
    %c0_6 = arith.constant 0 : index
    %4 = vector.load %arg5[%c0_5, %c0_6] : memref<8x128xbf16, #tpu.memory_space<vmem>>, vector<8x128xbf16>
    %c0_7 = arith.constant 0 : index
    %c0_8 = arith.constant 0 : index
    %c0_9 = arith.constant 0 : index
    %5 = vector.load %arg2[%c0_7, %c0_8, %c0_9] : memref<10x128x128xbf16, #tpu.memory_space<vmem>>, vector<1x128x128xbf16>
    %6 = vector.shape_cast %5 : vector<1x128x128xbf16> to vector<128x128xbf16>
    %cst_10 = arith.constant dense<0.000000e+00> : vector<8x128xf32>
    %7 = tpu.matmul %4, %6, %cst_10 {dimension_numbers = #tpu.dot_dimension_numbers<[1], [0], [0], [1], [0, 0, 1, 1], [], []>} : vector<8x128xbf16>, vector<128x128xbf16>, vector<8x128xf32> -> vector<8x128xf32>
    %c0_11 = arith.constant 0 : index
    %c0_12 = arith.constant 0 : index
    %8 = vector.load %arg3[%c0_11, %c0_12] : memref<16x128xf32, #tpu.memory_space<vmem>>, vector<1x128xf32>
    %9 = vector.broadcast %8 : vector<1x128xf32> to vector<8x128xf32>
    %10 = arith.addf %7, %9 : vector<8x128xf32>
    %cst_13 = arith.constant 0.000000e+00 : f32
    %11 = vector.broadcast %cst_13 : f32 to vector<8x128xf32>
    %12 = arith.maximumf %10, %11 : vector<8x128xf32>
    %13 = arith.truncf %12 : vector<8x128xf32> to vector<8x128xbf16>
    %c1 = arith.constant 1 : index
    %c0_14 = arith.constant 0 : index
    %c0_15 = arith.constant 0 : index
    %14 = vector.load %arg2[%c1, %c0_14, %c0_15] : memref<10x128x128xbf16, #tpu.memory_space<vmem>>, vector<1x128x128xbf16>
    %15 = vector.shape_cast %14 : vector<1x128x128xbf16> to vector<128x128xbf16>
    %cst_16 = arith.constant dense<0.000000e+00> : vector<8x128xf32>
    %16 = tpu.matmul %13, %15, %cst_16 {dimension_numbers = #tpu.dot_dimension_numbers<[1], [0], [0], [1], [0, 0, 1, 1], [], []>} : vector<8x128xbf16>, vector<128x128xbf16>, vector<8x128xf32> -> vector<8x128xf32>
    %c1_17 = arith.constant 1 : index
    %c0_18 = arith.constant 0 : index
    %17 = vector.load %arg3[%c1_17, %c0_18] : memref<16x128xf32, #tpu.memory_space<vmem>>, vector<1x128xf32>
    %18 = vector.broadcast %17 : vector<1x128xf32> to vector<8x128xf32>
    %19 = arith.addf %16, %18 : vector<8x128xf32>
    %cst_19 = arith.constant 0.000000e+00 : f32
    %20 = vector.broadcast %cst_19 : f32 to vector<8x128xf32>
    %21 = arith.maximumf %19, %20 : vector<8x128xf32>
    %22 = arith.truncf %21 : vector<8x128xf32> to vector<8x128xbf16>
    %c2 = arith.constant 2 : index
    %c0_20 = arith.constant 0 : index
    %c0_21 = arith.constant 0 : index
    %23 = vector.load %arg2[%c2, %c0_20, %c0_21] : memref<10x128x128xbf16, #tpu.memory_space<vmem>>, vector<1x128x128xbf16>
    %24 = vector.shape_cast %23 : vector<1x128x128xbf16> to vector<128x128xbf16>
    %cst_22 = arith.constant dense<0.000000e+00> : vector<8x128xf32>
    %25 = tpu.matmul %22, %24, %cst_22 {dimension_numbers = #tpu.dot_dimension_numbers<[1], [0], [0], [1], [0, 0, 1, 1], [], []>} : vector<8x128xbf16>, vector<128x128xbf16>, vector<8x128xf32> -> vector<8x128xf32>
    %c2_23 = arith.constant 2 : index
    %c0_24 = arith.constant 0 : index
    %26 = vector.load %arg3[%c2_23, %c0_24] : memref<16x128xf32, #tpu.memory_space<vmem>>, vector<1x128xf32>
    %27 = vector.broadcast %26 : vector<1x128xf32> to vector<8x128xf32>
    %28 = arith.addf %25, %27 : vector<8x128xf32>
    %cst_25 = arith.constant 0.000000e+00 : f32
    %29 = vector.broadcast %cst_25 : f32 to vector<8x128xf32>
    %30 = arith.maximumf %28, %29 : vector<8x128xf32>
    %31 = arith.truncf %30 : vector<8x128xf32> to vector<8x128xbf16>
    %c3 = arith.constant 3 : index
    %c0_26 = arith.constant 0 : index
    %c0_27 = arith.constant 0 : index
    %32 = vector.load %arg2[%c3, %c0_26, %c0_27] : memref<10x128x128xbf16, #tpu.memory_space<vmem>>, vector<1x128x128xbf16>
    %33 = vector.shape_cast %32 : vector<1x128x128xbf16> to vector<128x128xbf16>
    %cst_28 = arith.constant dense<0.000000e+00> : vector<8x128xf32>
    %34 = tpu.matmul %31, %33, %cst_28 {dimension_numbers = #tpu.dot_dimension_numbers<[1], [0], [0], [1], [0, 0, 1, 1], [], []>} : vector<8x128xbf16>, vector<128x128xbf16>, vector<8x128xf32> -> vector<8x128xf32>
    %c3_29 = arith.constant 3 : index
    %c0_30 = arith.constant 0 : index
    %35 = vector.load %arg3[%c3_29, %c0_30] : memref<16x128xf32, #tpu.memory_space<vmem>>, vector<1x128xf32>
    %36 = vector.broadcast %35 : vector<1x128xf32> to vector<8x128xf32>
    %37 = arith.addf %34, %36 : vector<8x128xf32>
    %cst_31 = arith.constant 0.000000e+00 : f32
    %38 = vector.broadcast %cst_31 : f32 to vector<8x128xf32>
    %39 = arith.maximumf %37, %38 : vector<8x128xf32>
    %40 = arith.truncf %39 : vector<8x128xf32> to vector<8x128xbf16>
    %c4 = arith.constant 4 : index
    %c0_32 = arith.constant 0 : index
    %c0_33 = arith.constant 0 : index
    %41 = vector.load %arg2[%c4, %c0_32, %c0_33] : memref<10x128x128xbf16, #tpu.memory_space<vmem>>, vector<1x128x128xbf16>
    %42 = vector.shape_cast %41 : vector<1x128x128xbf16> to vector<128x128xbf16>
    %cst_34 = arith.constant dense<0.000000e+00> : vector<8x128xf32>
    %43 = tpu.matmul %40, %42, %cst_34 {dimension_numbers = #tpu.dot_dimension_numbers<[1], [0], [0], [1], [0, 0, 1, 1], [], []>} : vector<8x128xbf16>, vector<128x128xbf16>, vector<8x128xf32> -> vector<8x128xf32>
    %c4_35 = arith.constant 4 : index
    %c0_36 = arith.constant 0 : index
    %44 = vector.load %arg3[%c4_35, %c0_36] : memref<16x128xf32, #tpu.memory_space<vmem>>, vector<1x128xf32>
    %45 = vector.broadcast %44 : vector<1x128xf32> to vector<8x128xf32>
    %46 = arith.addf %43, %45 : vector<8x128xf32>
    %cst_37 = arith.constant 0.000000e+00 : f32
    %47 = vector.broadcast %cst_37 : f32 to vector<8x128xf32>
    %48 = arith.maximumf %46, %47 : vector<8x128xf32>
    %49 = arith.truncf %48 : vector<8x128xf32> to vector<8x128xbf16>
    %c5 = arith.constant 5 : index
    %c0_38 = arith.constant 0 : index
    %c0_39 = arith.constant 0 : index
    %50 = vector.load %arg2[%c5, %c0_38, %c0_39] : memref<10x128x128xbf16, #tpu.memory_space<vmem>>, vector<1x128x128xbf16>
    %51 = vector.shape_cast %50 : vector<1x128x128xbf16> to vector<128x128xbf16>
    %cst_40 = arith.constant dense<0.000000e+00> : vector<8x128xf32>
    %52 = tpu.matmul %49, %51, %cst_40 {dimension_numbers = #tpu.dot_dimension_numbers<[1], [0], [0], [1], [0, 0, 1, 1], [], []>} : vector<8x128xbf16>, vector<128x128xbf16>, vector<8x128xf32> -> vector<8x128xf32>
    %c5_41 = arith.constant 5 : index
    %c0_42 = arith.constant 0 : index
    %53 = vector.load %arg3[%c5_41, %c0_42] : memref<16x128xf32, #tpu.memory_space<vmem>>, vector<1x128xf32>
    %54 = vector.broadcast %53 : vector<1x128xf32> to vector<8x128xf32>
    %55 = arith.addf %52, %54 : vector<8x128xf32>
    %cst_43 = arith.constant 0.000000e+00 : f32
    %56 = vector.broadcast %cst_43 : f32 to vector<8x128xf32>
    %57 = arith.maximumf %55, %56 : vector<8x128xf32>
    %58 = arith.truncf %57 : vector<8x128xf32> to vector<8x128xbf16>
    %c6 = arith.constant 6 : index
    %c0_44 = arith.constant 0 : index
    %c0_45 = arith.constant 0 : index
    %59 = vector.load %arg2[%c6, %c0_44, %c0_45] : memref<10x128x128xbf16, #tpu.memory_space<vmem>>, vector<1x128x128xbf16>
    %60 = vector.shape_cast %59 : vector<1x128x128xbf16> to vector<128x128xbf16>
    %cst_46 = arith.constant dense<0.000000e+00> : vector<8x128xf32>
    %61 = tpu.matmul %58, %60, %cst_46 {dimension_numbers = #tpu.dot_dimension_numbers<[1], [0], [0], [1], [0, 0, 1, 1], [], []>} : vector<8x128xbf16>, vector<128x128xbf16>, vector<8x128xf32> -> vector<8x128xf32>
    %c6_47 = arith.constant 6 : index
    %c0_48 = arith.constant 0 : index
    %62 = vector.load %arg3[%c6_47, %c0_48] : memref<16x128xf32, #tpu.memory_space<vmem>>, vector<1x128xf32>
    %63 = vector.broadcast %62 : vector<1x128xf32> to vector<8x128xf32>
    %64 = arith.addf %61, %63 : vector<8x128xf32>
    %cst_49 = arith.constant 0.000000e+00 : f32
    %65 = vector.broadcast %cst_49 : f32 to vector<8x128xf32>
    %66 = arith.maximumf %64, %65 : vector<8x128xf32>
    %67 = arith.truncf %66 : vector<8x128xf32> to vector<8x128xbf16>
    %c7 = arith.constant 7 : index
    %c0_50 = arith.constant 0 : index
    %c0_51 = arith.constant 0 : index
    %68 = vector.load %arg2[%c7, %c0_50, %c0_51] : memref<10x128x128xbf16, #tpu.memory_space<vmem>>, vector<1x128x128xbf16>
    %69 = vector.shape_cast %68 : vector<1x128x128xbf16> to vector<128x128xbf16>
    %cst_52 = arith.constant dense<0.000000e+00> : vector<8x128xf32>
    %70 = tpu.matmul %67, %69, %cst_52 {dimension_numbers = #tpu.dot_dimension_numbers<[1], [0], [0], [1], [0, 0, 1, 1], [], []>} : vector<8x128xbf16>, vector<128x128xbf16>, vector<8x128xf32> -> vector<8x128xf32>
    %c7_53 = arith.constant 7 : index
    %c0_54 = arith.constant 0 : index
    %71 = vector.load %arg3[%c7_53, %c0_54] : memref<16x128xf32, #tpu.memory_space<vmem>>, vector<1x128xf32>
    %72 = vector.broadcast %71 : vector<1x128xf32> to vector<8x128xf32>
    %73 = arith.addf %70, %72 : vector<8x128xf32>
    %cst_55 = arith.constant 0.000000e+00 : f32
    %74 = vector.broadcast %cst_55 : f32 to vector<8x128xf32>
    %75 = arith.maximumf %73, %74 : vector<8x128xf32>
    %76 = arith.truncf %75 : vector<8x128xf32> to vector<8x128xbf16>
    %c8 = arith.constant 8 : index
    %c0_56 = arith.constant 0 : index
    %c0_57 = arith.constant 0 : index
    %77 = vector.load %arg2[%c8, %c0_56, %c0_57] : memref<10x128x128xbf16, #tpu.memory_space<vmem>>, vector<1x128x128xbf16>
    %78 = vector.shape_cast %77 : vector<1x128x128xbf16> to vector<128x128xbf16>
    %cst_58 = arith.constant dense<0.000000e+00> : vector<8x128xf32>
    %79 = tpu.matmul %76, %78, %cst_58 {dimension_numbers = #tpu.dot_dimension_numbers<[1], [0], [0], [1], [0, 0, 1, 1], [], []>} : vector<8x128xbf16>, vector<128x128xbf16>, vector<8x128xf32> -> vector<8x128xf32>
    %c8_59 = arith.constant 8 : index
    %c0_60 = arith.constant 0 : index
    %80 = vector.load %arg3[%c8_59, %c0_60] : memref<16x128xf32, #tpu.memory_space<vmem>>, vector<1x128xf32>
    %81 = vector.broadcast %80 : vector<1x128xf32> to vector<8x128xf32>
    %82 = arith.addf %79, %81 : vector<8x128xf32>
    %cst_61 = arith.constant 0.000000e+00 : f32
    %83 = vector.broadcast %cst_61 : f32 to vector<8x128xf32>
    %84 = arith.maximumf %82, %83 : vector<8x128xf32>
    %85 = arith.truncf %84 : vector<8x128xf32> to vector<8x128xbf16>
    %c9 = arith.constant 9 : index
    %c0_62 = arith.constant 0 : index
    %c0_63 = arith.constant 0 : index
    %86 = vector.load %arg2[%c9, %c0_62, %c0_63] : memref<10x128x128xbf16, #tpu.memory_space<vmem>>, vector<1x128x128xbf16>
    %87 = vector.shape_cast %86 : vector<1x128x128xbf16> to vector<128x128xbf16>
    %cst_64 = arith.constant dense<0.000000e+00> : vector<8x128xf32>
    %88 = tpu.matmul %85, %87, %cst_64 {dimension_numbers = #tpu.dot_dimension_numbers<[1], [0], [0], [1], [0, 0, 1, 1], [], []>} : vector<8x128xbf16>, vector<128x128xbf16>, vector<8x128xf32> -> vector<8x128xf32>
    %c9_65 = arith.constant 9 : index
    %c0_66 = arith.constant 0 : index
    %89 = vector.load %arg3[%c9_65, %c0_66] : memref<16x128xf32, #tpu.memory_space<vmem>>, vector<1x128xf32>
    %90 = vector.broadcast %89 : vector<1x128xf32> to vector<8x128xf32>
    %91 = arith.addf %88, %90 : vector<8x128xf32>
    %92 = vector.extract_strided_slice %91 {offsets = [0, 0], sizes = [8, 4], strides = [1, 1]} : vector<8x128xf32> to vector<8x4xf32>
    %c0_67 = arith.constant 0 : index
    %c0_68 = arith.constant 0 : index
    %93 = vector.load %arg4[%c0_67, %c0_68] : memref<8x4xf32, #tpu.memory_space<vmem>>, vector<8x4xf32>
    tpu.vector_store %arg4[%c0_67, %c0_68], %92 {strides = array<i32>} : memref<8x4xf32, #tpu.memory_space<vmem>>, vector<8x4xf32>,
    return
  }
  func.func @transform_0(%arg0: i32) -> (i32, i32) {
    %c0_i32 = arith.constant 0 : i32
    %c0_i32_0 = arith.constant 0 : i32
    return %arg0, %c0_i32 : i32, i32
  }
  func.func @transform_1(%arg0: i32) -> (i32, i32, i32) {
    %c0_i32 = arith.constant 0 : i32
    %c0_i32_0 = arith.constant 0 : i32
    %c0_i32_1 = arith.constant 0 : i32
    %c0_i32_2 = arith.constant 0 : i32
    return %c0_i32, %c0_i32_0, %c0_i32_1 : i32, i32, i32
  }
  func.func @transform_2(%arg0: i32) -> (i32, i32) {
    %c0_i32 = arith.constant 0 : i32
    %c0_i32_0 = arith.constant 0 : i32
    %c0_i32_1 = arith.constant 0 : i32
    return %c0_i32, %c0_i32_0 : i32, i32
  }
  func.func @transform_3(%arg0: i32) -> (i32, i32) {
    %c0_i32 = arith.constant 0 : i32
    %c0_i32_0 = arith.constant 0 : i32
    return %arg0, %c0_i32 : i32, i32
  }
}

</mosaic_0001>

<llo_original>
// kernel: _forward_impl.1
$region0: #{_forward_impl.1}
  #allocation0 [shape = 'u32[]', space=smem, size = 0x4, offset = 0x4, fixed_abs, tag = 'smem constant byte address 0x4 - core index']
  #allocation1 [shape = 'u32[144,128]{1,0:T(1,128)}', space=vmem, size = 0x12000, scoped, tag = 'internal scratch']
  #allocation2 [shape = 'bf16[8,128]{1,0:T(8,128)(2,1)}', space=vmem, size = 0x800, scoped, tag = 'scratch operand']
  %s0 = inlined_call_operand.vmem [shape: bf16[8,16], index: 0, kind: input, shape index: {}]
  %s1 = inlined_call_operand.hbm [shape: bf16[10,128,128], index: 1, kind: input, shape index: {}]
  %s2 = inlined_call_operand.hbm [shape: f32[16,128], index: 2, kind: input, shape index: {}]
  %s3 = inlined_call_operand.vmem [shape: f32[8,4], index: 3, kind: output, shape index: {}]
  %s4 = sld [smem:[#allocation0]]
  $region30: #{_forward_impl.1} parent=0
    _
  %s6 = ssub.s32 1, %s4
  %s7 = scalar_select 0, %s6, %s4
  $region1: #{_forward_impl.1} parent=0
    #allocation3 [shape = 'u8[327680]{0}', space=vmem, size = 0x50000, scoped, tag = 'input window, operand 1, single buffered']
    #allocation4 [shape = 's32[1]{0}', space=sflag, size = 0x4, scoped, tag = 'scoped memory for _forward_impl.1']
    #allocation5 [shape = 'u8[8192]{0}', space=vmem, size = 0x2000, scoped, tag = 'input window, operand 2, single buffered']
    #allocation6 [shape = 's32[1]{0}', space=sflag, size = 0x4, scoped, tag = 'scoped memory for _forward_impl.1']
    %8 = vsyncpa [#allocation4], 0
    %9 = vsyncpa [#allocation6], 0
    // Predicated region
    $region2: #{_forward_impl.1} parent=1 // pred_check
      _
    $region3: #{_forward_impl.1} parent=1 // pred_check_branch
      %11 = sbr.rel (0) target = $region5
    $region4: #{_forward_impl.1} parent=1 // pred_region
      _
    $region5: #{_forward_impl.1} parent=1 // pred_fallthru
      _
    // Predicated region
    $region6: #{_forward_impl.1} parent=1 // pred_check
      _
    $region7: #{_forward_impl.1} parent=1 // pred_check_branch
      %13 = sbr.rel (0) target = $region9
    $region8: #{_forward_impl.1} parent=1 // pred_region
      %s15 = ssub.s32 10240, 10240
      %16 = vsyncadd [#allocation4], %s15
      %s17 = sshll.u32 [#allocation3], 4
      %s18 = int_to_ptr.vmem [resolvable:$true] %s17
      %23 = dma.hbm_to_vmem [thread:$0]  %s1, 10240, %s18, [#allocation4], 64, 64, 4
    $region9: #{_forward_impl.1} parent=1 // pred_fallthru
      _
    // Predicated region
    $region10: #{_forward_impl.1} parent=1 // pred_check
      _
    $region11: #{_forward_impl.1} parent=1 // pred_check_branch
      %25 = sbr.rel (0) target = $region13
    $region12: #{_forward_impl.1} parent=1 // pred_region
      %s27 = ssub.s32 256, 256
      %28 = vsyncadd [#allocation6], %s27
      %s29 = sshll.u32 [#allocation5], 4
      %s30 = int_to_ptr.vmem [resolvable:$true] %s29
      %35 = dma.hbm_to_vmem [thread:$0]  %s2, 256, %s30, [#allocation6], 128, 128, 8
    $region13: #{_forward_impl.1} parent=1 // pred_fallthru
      _
    // Predicated region
    $region14: #{_forward_impl.1} parent=1 // pred_check
      _
    $region15: #{_forward_impl.1} parent=1 // pred_check_branch
      %37 = sbr.rel (0) target = $region17
    $region16: #{_forward_impl.1} parent=1 // pred_region
      %38 = dma.done [#allocation4], 10240
    $region17: #{_forward_impl.1} parent=1 // pred_fallthru
      _
    // Predicated region
    $region18: #{_forward_impl.1} parent=1 // pred_check
      _
    $region19: #{_forward_impl.1} parent=1 // pred_check_branch
      %40 = sbr.rel (0) target = $region21
    $region20: #{_forward_impl.1} parent=1 // pred_region
      %41 = dma.done [#allocation6], 256
    $region21: #{_forward_impl.1} parent=1 // pred_fallthru
      _
    %43 = vst [vmem:[#allocation2] sm:$0xf] 0
    %v44 = vld [vmem:[%s0] sm:$0xf]
    %vm45 = vcmask 125952
    %46 = vst.msk [vmem:[#allocation2] sm:$0xf] %vm45, %v44
    %v47 = vld [vmem:[#allocation2] sm:$0xf]
    %v48 = vld [vmem:[#allocation3] sm:$0xf]
    %v49 = vld [vmem:[#allocation3 + $0x4] sm:$0xf]
    %v50 = vld [vmem:[#allocation3 + $0x8] sm:$0xf]
    %v51 = vld [vmem:[#allocation3 + $0xc] sm:$0xf]
    %v52 = vld [vmem:[#allocation3 + $0x10] sm:$0xf]
    %v53 = vld [vmem:[#allocation3 + $0x14] sm:$0xf]
    %v54 = vld [vmem:[#allocation3 + $0x18] sm:$0xf]
    %v55 = vld [vmem:[#allocation3 + $0x1c] sm:$0xf]
    %v56 = vld [vmem:[#allocation3 + $0x20] sm:$0xf]
    %v57 = vld [vmem:[#allocation3 + $0x24] sm:$0xf]
    %v58 = vld [vmem:[#allocation3 + $0x28] sm:$0xf]
    %v59 = vld [vmem:[#allocation3 + $0x2c] sm:$0xf]
    %v60 = vld [vmem:[#allocation3 + $0x30] sm:$0xf]
    %v61 = vld [vmem:[#allocation3 + $0x34] sm:$0xf]
    %v62 = vld [vmem:[#allocation3 + $0x38] sm:$0xf]
    %v63 = vld [vmem:[#allocation3 + $0x3c] sm:$0xf]
    %v64 = vld [vmem:[#allocation5] sm:$0x1]
    %v65 = vlaneseq
    %v66 = vshrl.u32 %v65, 7
    %v67 = vsub.s32 0, %v66
    %v68 = vrot.slane %v64, %v67
    %v85 = vunpack.c.l.b16 %v48
    %v86 = vunpack.c.l.b16 %v49
    %v87 = vunpack.c.l.b16 %v50
    %v88 = vunpack.c.l.b16 %v51
    %v89 = vunpack.c.l.b16 %v52
    %v90 = vunpack.c.l.b16 %v53
    %v91 = vunpack.c.l.b16 %v54
    %v92 = vunpack.c.l.b16 %v55
    %v93 = vunpack.c.l.b16 %v56
    %v94 = vunpack.c.l.b16 %v57
    %v95 = vunpack.c.l.b16 %v58
    %v96 = vunpack.c.l.b16 %v59
    %v97 = vunpack.c.l.b16 %v60
    %v98 = vunpack.c.l.b16 %v61
    %v99 = vunpack.c.l.b16 %v62
    %v100 = vunpack.c.l.b16 %v63
    %v101 = vpack.c.b16 %v86, %v85
    %v102 = vpack.c.b16 %v88, %v87
    %v103 = vpack.c.b16 %v90, %v89
    %v104 = vpack.c.b16 %v92, %v91
    %v105 = vpack.c.b16 %v94, %v93
    %v106 = vpack.c.b16 %v96, %v95
    %v107 = vpack.c.b16 %v98, %v97
    %v108 = vpack.c.b16 %v100, %v99
    %117 = vmatprep.subr.bf16.mxu0 0
    %118 = vmatpush1.bf16.msra.mxu0 %v108
    %119 = vmatprep.subr.bf16.mxu0 0
    %120 = vmatpush1.bf16.msra.mxu0 %v107
    %121 = vmatprep.subr.bf16.mxu0 0
    %122 = vmatpush1.bf16.msra.mxu0 %v106
    %123 = vmatprep.subr.bf16.mxu0 0
    %124 = vmatpush1.bf16.msra.mxu0 %v105
    %125 = vmatprep.subr.bf16.mxu0 0
    %126 = vmatpush1.bf16.msra.mxu0 %v104
    %127 = vmatprep.subr.bf16.mxu0 0
    %128 = vmatpush1.bf16.msra.mxu0 %v103
    %129 = vmatprep.subr.bf16.mxu0 0
    %130 = vmatpush1.bf16.msra.mxu0 %v102
    %131 = vmatprep.subr.bf16.mxu0 0
    %132 = vmatpush1.bf16.msra.mxu0 %v101
    %133 = vmatprep.subr.bf16.mxu0 0
    %134 = vmatpush2.bf16.msra.mxu0 0
    %135 = vmatprep.subr.bf16.mxu0 0
    %136 = vmatpush2.bf16.msra.mxu0 0
    %137 = vmatprep.subr.bf16.mxu0 0
    %138 = vmatpush2.bf16.msra.mxu0 0
    %139 = vmatprep.subr.bf16.mxu0 0
    %140 = vmatpush2.bf16.msra.mxu0 0
    %141 = vmatprep.subr.bf16.mxu0 0
    %142 = vmatpush2.bf16.msra.mxu0 0
    %143 = vmatprep.subr.bf16.mxu0 0
    %144 = vmatpush2.bf16.msra.mxu0 0
    %145 = vmatprep.subr.bf16.mxu0 0
    %146 = vmatpush2.bf16.msra.mxu0 0
    %147 = vmatprep.subr.bf16.mxu0 0
    %148 = vmatpush2.bf16.msra.mxu0 0
    %149 = vmatprep.mubr.bf16.mxu0 0
    %150 = vmatmul.mubr.bf16.gmra.mxu0 %v47
    %v151 = vpop.f32.mrf.mxu0
    %v152 = vadd.f32 %v68, %v151
    %v153 = vpop.f32.mrf.mxu0
    %v154 = vpop.f32.mrf.mxu0
    %v155 = vpop.f32.mrf.mxu0
    %156 = vdwg.mxu0
    %v157 = vmax.f32 %v152, 0.0
    %v158 = vpack.c.bf16 %v157, %v157
    %s159 = scalar_lea.vmem [#allocation3], 64
    %v160 = vld [vmem:[%s159] sm:$0xf]
    %v161 = vld [vmem:[%s159 + $0x4] sm:$0xf]
    %v162 = vld [vmem:[%s159 + $0x8] sm:$0xf]
    %v163 = vld [vmem:[%s159 + $0xc] sm:$0xf]
    %v164 = vld [vmem:[%s159 + $0x10] sm:$0xf]
    %v165 = vld [vmem:[%s159 + $0x14] sm:$0xf]
    %v166 = vld [vmem:[%s159 + $0x18] sm:$0xf]
    %v167 = vld [vmem:[%s159 + $0x1c] sm:$0xf]
    %v168 = vld [vmem:[%s159 + $0x20] sm:$0xf]
    %v169 = vld [vmem:[%s159 + $0x24] sm:$0xf]
    %v170 = vld [vmem:[%s159 + $0x28] sm:$0xf]
    %v171 = vld [vmem:[%s159 + $0x2c] sm:$0xf]
    %v172 = vld [vmem:[%s159 + $0x30] sm:$0xf]
    %v173 = vld [vmem:[%s159 + $0x34] sm:$0xf]
    %v174 = vld [vmem:[%s159 + $0x38] sm:$0xf]
    %v175 = vld [vmem:[%s159 + $0x3c] sm:$0xf]
    %v176 = vld [vmem:[#allocation5 + $0x1] sm:$0x1]
    %v177 = vlaneseq
    %v178 = vshrl.u32 %v177, 7
    %v179 = vsub.s32 0, %v178
    %v180 = vrot.slane %v176, %v179
    %v197 = vunpack.c.l.b16 %v160
    %v198 = vunpack.c.l.b16 %v161
    %v199 = vunpack.c.l.b16 %v162
    %v200 = vunpack.c.l.b16 %v163
    %v201 = vunpack.c.l.b16 %v164
    %v202 = vunpack.c.l.b16 %v165
    %v203 = vunpack.c.l.b16 %v166
    %v204 = vunpack.c.l.b16 %v167
    %v205 = vunpack.c.l.b16 %v168
    %v206 = vunpack.c.l.b16 %v169
    %v207 = vunpack.c.l.b16 %v170
    %v208 = vunpack.c.l.b16 %v171
    %v209 = vunpack.c.l.b16 %v172
    %v210 = vunpack.c.l.b16 %v173
    %v211 = vunpack.c.l.b16 %v174
    %v212 = vunpack.c.l.b16 %v175
    %v213 = vpack.c.b16 %v198, %v197
    %v214 = vpack.c.b16 %v200, %v199
    %v215 = vpack.c.b16 %v202, %v201
    %v216 = vpack.c.b16 %v204, %v203
    %v217 = vpack.c.b16 %v206, %v205
    %v218 = vpack.c.b16 %v208, %v207
    %v219 = vpack.c.b16 %v210, %v209
    %v220 = vpack.c.b16 %v212, %v211
    %229 = vmatprep.subr.bf16.mxu0 0
    %230 = vmatpush1.bf16.msra.mxu0 %v220
    %231 = vmatprep.subr.bf16.mxu0 0
    %232 = vmatpush1.bf16.msra.mxu0 %v219
    %233 = vmatprep.subr.bf16.mxu0 0
    %234 = vmatpush1.bf16.msra.mxu0 %v218
    %235 = vmatprep.subr.bf16.mxu0 0
    %236 = vmatpush1.bf16.msra.mxu0 %v217
    %237 = vmatprep.subr.bf16.mxu0 0
    %238 = vmatpush1.bf16.msra.mxu0 %v216
    %239 = vmatprep.subr.bf16.mxu0 0
    %240 = vmatpush1.bf16.msra.mxu0 %v215
    %241 = vmatprep.subr.bf16.mxu0 0
    %242 = vmatpush1.bf16.msra.mxu0 %v214
    %243 = vmatprep.subr.bf16.mxu0 0
    %244 = vmatpush1.bf16.msra.mxu0 %v213
    %245 = vmatprep.subr.bf16.mxu0 0
    %246 = vmatpush2.bf16.msra.mxu0 0
    %247 = vmatprep.subr.bf16.mxu0 0
    %248 = vmatpush2.bf16.msra.mxu0 0
    %249 = vmatprep.subr.bf16.mxu0 0
    %250 = vmatpush2.bf16.msra.mxu0 0
    %251 = vmatprep.subr.bf16.mxu0 0
    %252 = vmatpush2.bf16.msra.mxu0 0
    %253 = vmatprep.subr.bf16.mxu0 0
    %254 = vmatpush2.bf16.msra.mxu0 0
    %255 = vmatprep.subr.bf16.mxu0 0
    %256 = vmatpush2.bf16.msra.mxu0 0
    %257 = vmatprep.subr.bf16.mxu0 0
    %258 = vmatpush2.bf16.msra.mxu0 0
    %259 = vmatprep.subr.bf16.mxu0 0
    %260 = vmatpush2.bf16.msra.mxu0 0
    %261 = vmatprep.mubr.bf16.mxu0 0
    %262 = vmatmul.mubr.bf16.gmra.mxu0 %v158
    %v263 = vpop.f32.mrf.mxu0
    %v264 = vadd.f32 %v180, %v263
    %v265 = vpop.f32.mrf.mxu0
    %v266 = vpop.f32.mrf.mxu0
    %v267 = vpop.f32.mrf.mxu0
    %268 = vdwg.mxu0
    %v269 = vmax.f32 %v264, 0.0
    %v270 = vpack.c.bf16 %v269, %v269
    %s271 = scalar_lea.vmem [#allocation3], 128
    %v272 = vld [vmem:[%s271] sm:$0xf]
    %v273 = vld [vmem:[%s271 + $0x4] sm:$0xf]
    %v274 = vld [vmem:[%s271 + $0x8] sm:$0xf]
    %v275 = vld [vmem:[%s271 + $0xc] sm:$0xf]
    %v276 = vld [vmem:[%s271 + $0x10] sm:$0xf]
    %v277 = vld [vmem:[%s271 + $0x14] sm:$0xf]
    %v278 = vld [vmem:[%s271 + $0x18] sm:$0xf]
    %v279 = vld [vmem:[%s271 + $0x1c] sm:$0xf]
    %v280 = vld [vmem:[%s271 + $0x20] sm:$0xf]
    %v281 = vld [vmem:[%s271 + $0x24] sm:$0xf]
    %v282 = vld [vmem:[%s271 + $0x28] sm:$0xf]
    %v283 = vld [vmem:[%s271 + $0x2c] sm:$0xf]
    %v284 = vld [vmem:[%s271 + $0x30] sm:$0xf]
    %v285 = vld [vmem:[%s271 + $0x34] sm:$0xf]
    %v286 = vld [vmem:[%s271 + $0x38] sm:$0xf]
    %v287 = vld [vmem:[%s271 + $0x3c] sm:$0xf]
    %v288 = vld [vmem:[#allocation5 + $0x2] sm:$0x1]
    %v289 = vlaneseq
    %v290 = vshrl.u32 %v289, 7
    %v291 = vsub.s32 0, %v290
    %v292 = vrot.slane %v288, %v291
    %v309 = vunpack.c.l.b16 %v272
    %v310 = vunpack.c.l.b16 %v273
    %v311 = vunpack.c.l.b16 %v274
    %v312 = vunpack.c.l.b16 %v275
    %v313 = vunpack.c.l.b16 %v276
    %v314 = vunpack.c.l.b16 %v277
    %v315 = vunpack.c.l.b16 %v278
    %v316 = vunpack.c.l.b16 %v279
    %v317 = vunpack.c.l.b16 %v280
    %v318 = vunpack.c.l.b16 %v281
    %v319 = vunpack.c.l.b16 %v282
    %v320 = vunpack.c.l.b16 %v283
    %v321 = vunpack.c.l.b16 %v284
    %v322 = vunpack.c.l.b16 %v285
    %v323 = vunpack.c.l.b16 %v286
    %v324 = vunpack.c.l.b16 %v287
    %v325 = vpack.c.b16 %v310, %v309
    %v326 = vpack.c.b16 %v312, %v311
    %v327 = vpack.c.b16 %v314, %v313
    %v328 = vpack.c.b16 %v316, %v315
    %v329 = vpack.c.b16 %v318, %v317
    %v330 = vpack.c.b16 %v320, %v319
    %v331 = vpack.c.b16 %v322, %v321
    %v332 = vpack.c.b16 %v324, %v323
    %341 = vmatprep.subr.bf16.mxu0 0
    %342 = vmatpush1.bf16.msra.mxu0 %v332
    %343 = vmatprep.subr.bf16.mxu0 0
    %344 = vmatpush1.bf16.msra.mxu0 %v331
    %345 = vmatprep.subr.bf16.mxu0 0
    %346 = vmatpush1.bf16.msra.mxu0 %v330
    %347 = vmatprep.subr.bf16.mxu0 0
    %348 = vmatpush1.bf16.msra.mxu0 %v329
    %349 = vmatprep.subr.bf16.mxu0 0
    %350 = vmatpush1.bf16.msra.mxu0 %v328
    %351 = vmatprep.subr.bf16.mxu0 0
    %352 = vmatpush1.bf16.msra.mxu0 %v327
    %353 = vmatprep.subr.bf16.mxu0 0
    %354 = vmatpush1.bf16.msra.mxu0 %v326
    %355 = vmatprep.subr.bf16.mxu0 0
    %356 = vmatpush1.bf16.msra.mxu0 %v325
    %357 = vmatprep.subr.bf16.mxu0 0
    %358 = vmatpush2.bf16.msra.mxu0 0
    %359 = vmatprep.subr.bf16.mxu0 0
    %360 = vmatpush2.bf16.msra.mxu0 0
    %361 = vmatprep.subr.bf16.mxu0 0
    %362 = vmatpush2.bf16.msra.mxu0 0
    %363 = vmatprep.subr.bf16.mxu0 0
    %364 = vmatpush2.bf16.msra.mxu0 0
    %365 = vmatprep.subr.bf16.mxu0 0
    %366 = vmatpush2.bf16.msra.mxu0 0
    %367 = vmatprep.subr.bf16.mxu0 0
    %368 = vmatpush2.bf16.msra.mxu0 0
    %369 = vmatprep.subr.bf16.mxu0 0
    %370 = vmatpush2.bf16.msra.mxu0 0
    %371 = vmatprep.subr.bf16.mxu0 0
    %372 = vmatpush2.bf16.msra.mxu0 0
    %373 = vmatprep.mubr.bf16.mxu0 0
    %374 = vmatmul.mubr.bf16.gmra.mxu0 %v270
    %v375 = vpop.f32.mrf.mxu0
    %v376 = vadd.f32 %v292, %v375
    %v377 = vpop.f32.mrf.mxu0
    %v378 = vpop.f32.mrf.mxu0
    %v379 = vpop.f32.mrf.mxu0
    %380 = vdwg.mxu0
    %v381 = vmax.f32 %v376, 0.0
    %v382 = vpack.c.bf16 %v381, %v381
    %s383 = scalar_lea.vmem [#allocation3], 192
    %v384 = vld [vmem:[%s383] sm:$0xf]
    %v385 = vld [vmem:[%s383 + $0x4] sm:$0xf]
    %v386 = vld [vmem:[%s383 + $0x8] sm:$0xf]
    %v387 = vld [vmem:[%s383 + $0xc] sm:$0xf]
    %v388 = vld [vmem:[%s383 + $0x10] sm:$0xf]
    %v389 = vld [vmem:[%s383 + $0x14] sm:$0xf]
    %v390 = vld [vmem:[%s383 + $0x18] sm:$0xf]
    %v391 = vld [vmem:[%s383 + $0x1c] sm:$0xf]
    %v392 = vld [vmem:[%s383 + $0x20] sm:$0xf]
    %v393 = vld [vmem:[%s383 + $0x24] sm:$0xf]
    %v394 = vld [vmem:[%s383 + $0x28] sm:$0xf]
    %v395 = vld [vmem:[%s383 + $0x2c] sm:$0xf]
    %v396 = vld [vmem:[%s383 + $0x30] sm:$0xf]
    %v397 = vld [vmem:[%s383 + $0x34] sm:$0xf]
    %v398 = vld [vmem:[%s383 + $0x38] sm:$0xf]
    %v399 = vld [vmem:[%s383 + $0x3c] sm:$0xf]
    %v400 = vld [vmem:[#allocation5 + $0x3] sm:$0x1]
    %v401 = vlaneseq
    %v402 = vshrl.u32 %v401, 7
    %v403 = vsub.s32 0, %v402
    %v404 = vrot.slane %v400, %v403
    %v421 = vunpack.c.l.b16 %v384
    %v422 = vunpack.c.l.b16 %v385
    %v423 = vunpack.c.l.b16 %v386
    %v424 = vunpack.c.l.b16 %v387
    %v425 = vunpack.c.l.b16 %v388
    %v426 = vunpack.c.l.b16 %v389
    %v427 = vunpack.c.l.b16 %v390
    %v428 = vunpack.c.l.b16 %v391
    %v429 = vunpack.c.l.b16 %v392
    %v430 = vunpack.c.l.b16 %v393
    %v431 = vunpack.c.l.b16 %v394
    %v432 = vunpack.c.l.b16 %v395
    %v433 = vunpack.c.l.b16 %v396
    %v434 = vunpack.c.l.b16 %v397
    %v435 = vunpack.c.l.b16 %v398
    %v436 = vunpack.c.l.b16 %v399
    %v437 = vpack.c.b16 %v422, %v421
    %v438 = vpack.c.b16 %v424, %v423
    %v439 = vpack.c.b16 %v426, %v425
    %v440 = vpack.c.b16 %v428, %v427
    %v441 = vpack.c.b16 %v430, %v429
    %v442 = vpack.c.b16 %v432, %v431
    %v443 = vpack.c.b16 %v434, %v433
    %v444 = vpack.c.b16 %v436, %v435
    %453 = vmatprep.subr.bf16.mxu0 0
    %454 = vmatpush1.bf16.msra.mxu0 %v444
    %455 = vmatprep.subr.bf16.mxu0 0
    %456 = vmatpush1.bf16.msra.mxu0 %v443
    %457 = vmatprep.subr.bf16.mxu0 0
    %458 = vmatpush1.bf16.msra.mxu0 %v442
    %459 = vmatprep.subr.bf16.mxu0 0
    %460 = vmatpush1.bf16.msra.mxu0 %v441
    %461 = vmatprep.subr.bf16.mxu0 0
    %462 = vmatpush1.bf16.msra.mxu0 %v440
    %463 = vmatprep.subr.bf16.mxu0 0
    %464 = vmatpush1.bf16.msra.mxu0 %v439
    %465 = vmatprep.subr.bf16.mxu0 0
    %466 = vmatpush1.bf16.msra.mxu0 %v438
    %467 = vmatprep.subr.bf16.mxu0 0
    %468 = vmatpush1.bf16.msra.mxu0 %v437
    %469 = vmatprep.subr.bf16.mxu0 0
    %470 = vmatpush2.bf16.msra.mxu0 0
    %471 = vmatprep.subr.bf16.mxu0 0
    %472 = vmatpush2.bf16.msra.mxu0 0
    %473 = vmatprep.subr.bf16.mxu0 0
    %474 = vmatpush2.bf16.msra.mxu0 0
    %475 = vmatprep.subr.bf16.mxu0 0
    %476 = vmatpush2.bf16.msra.mxu0 0
    %477 = vmatprep.subr.bf16.mxu0 0
    %478 = vmatpush2.bf16.msra.mxu0 0
    %479 = vmatprep.subr.bf16.mxu0 0
    %480 = vmatpush2.bf16.msra.mxu0 0
    %481 = vmatprep.subr.bf16.mxu0 0
    %482 = vmatpush2.bf16.msra.mxu0 0
    %483 = vmatprep.subr.bf16.mxu0 0
    %484 = vmatpush2.bf16.msra.mxu0 0
    %485 = vmatprep.mubr.bf16.mxu0 0
    %486 = vmatmul.mubr.bf16.gmra.mxu0 %v382
    %v487 = vpop.f32.mrf.mxu0
    %v488 = vadd.f32 %v404, %v487
    %v489 = vpop.f32.mrf.mxu0
    %v490 = vpop.f32.mrf.mxu0
    %v491 = vpop.f32.mrf.mxu0
    %492 = vdwg.mxu0
    %v493 = vmax.f32 %v488, 0.0
    %v494 = vpack.c.bf16 %v493, %v493
    %s495 = scalar_lea.vmem [#allocation3], 256
    %v496 = vld [vmem:[%s495] sm:$0xf]
    %v497 = vld [vmem:[%s495 + $0x4] sm:$0xf]
    %v498 = vld [vmem:[%s495 + $0x8] sm:$0xf]
    %v499 = vld [vmem:[%s495 + $0xc] sm:$0xf]
    %v500 = vld [vmem:[%s495 + $0x10] sm:$0xf]
    %v501 = vld [vmem:[%s495 + $0x14] sm:$0xf]
    %v502 = vld [vmem:[%s495 + $0x18] sm:$0xf]
    %v503 = vld [vmem:[%s495 + $0x1c] sm:$0xf]
    %v504 = vld [vmem:[%s495 + $0x20] sm:$0xf]
    %v505 = vld [vmem:[%s495 + $0x24] sm:$0xf]
    %v506 = vld [vmem:[%s495 + $0x28] sm:$0xf]
    %v507 = vld [vmem:[%s495 + $0x2c] sm:$0xf]
    %v508 = vld [vmem:[%s495 + $0x30] sm:$0xf]
    %v509 = vld [vmem:[%s495 + $0x34] sm:$0xf]
    %v510 = vld [vmem:[%s495 + $0x38] sm:$0xf]
    %v511 = vld [vmem:[%s495 + $0x3c] sm:$0xf]
    %v512 = vld [vmem:[#allocation5 + $0x4] sm:$0x1]
    %v513 = vlaneseq
    %v514 = vshrl.u32 %v513, 7
    %v515 = vsub.s32 0, %v514
    %v516 = vrot.slane %v512, %v515
    %v533 = vunpack.c.l.b16 %v496
    %v534 = vunpack.c.l.b16 %v497
    %v535 = vunpack.c.l.b16 %v498
    %v536 = vunpack.c.l.b16 %v499
    %v537 = vunpack.c.l.b16 %v500
    %v538 = vunpack.c.l.b16 %v501
    %v539 = vunpack.c.l.b16 %v502
    %v540 = vunpack.c.l.b16 %v503
    %v541 = vunpack.c.l.b16 %v504
    %v542 = vunpack.c.l.b16 %v505
    %v543 = vunpack.c.l.b16 %v506
    %v544 = vunpack.c.l.b16 %v507
    %v545 = vunpack.c.l.b16 %v508
    %v546 = vunpack.c.l.b16 %v509
    %v547 = vunpack.c.l.b16 %v510
    %v548 = vunpack.c.l.b16 %v511
    %v549 = vpack.c.b16 %v534, %v533
    %v550 = vpack.c.b16 %v536, %v535
    %v551 = vpack.c.b16 %v538, %v537
    %v552 = vpack.c.b16 %v540, %v539
    %v553 = vpack.c.b16 %v542, %v541
    %v554 = vpack.c.b16 %v544, %v543
    %v555 = vpack.c.b16 %v546, %v545
    %v556 = vpack.c.b16 %v548, %v547
    %565 = vmatprep.subr.bf16.mxu0 0
    %566 = vmatpush1.bf16.msra.mxu0 %v556
    %567 = vmatprep.subr.bf16.mxu0 0
    %568 = vmatpush1.bf16.msra.mxu0 %v555
    %569 = vmatprep.subr.bf16.mxu0 0
    %570 = vmatpush1.bf16.msra.mxu0 %v554
    %571 = vmatprep.subr.bf16.mxu0 0
    %572 = vmatpush1.bf16.msra.mxu0 %v553
    %573 = vmatprep.subr.bf16.mxu0 0
    %574 = vmatpush1.bf16.msra.mxu0 %v552
    %575 = vmatprep.subr.bf16.mxu0 0
    %576 = vmatpush1.bf16.msra.mxu0 %v551
    %577 = vmatprep.subr.bf16.mxu0 0
    %578 = vmatpush1.bf16.msra.mxu0 %v550
    %579 = vmatprep.subr.bf16.mxu0 0
    %580 = vmatpush1.bf16.msra.mxu0 %v549
    %581 = vmatprep.subr.bf16.mxu0 0
    %582 = vmatpush2.bf16.msra.mxu0 0
    %583 = vmatprep.subr.bf16.mxu0 0
    %584 = vmatpush2.bf16.msra.mxu0 0
    %585 = vmatprep.subr.bf16.mxu0 0
    %586 = vmatpush2.bf16.msra.mxu0 0
    %587 = vmatprep.subr.bf16.mxu0 0
    %588 = vmatpush2.bf16.msra.mxu0 0
    %589 = vmatprep.subr.bf16.mxu0 0
    %590 = vmatpush2.bf16.msra.mxu0 0
    %591 = vmatprep.subr.bf16.mxu0 0
    %592 = vmatpush2.bf16.msra.mxu0 0
    %593 = vmatprep.subr.bf16.mxu0 0
    %594 = vmatpush2.bf16.msra.mxu0 0
    %595 = vmatprep.subr.bf16.mxu0 0
    %596 = vmatpush2.bf16.msra.mxu0 0
    %597 = vmatprep.mubr.bf16.mxu0 0
    %598 = vmatmul.mubr.bf16.gmra.mxu0 %v494
    %v599 = vpop.f32.mrf.mxu0
    %v600 = vadd.f32 %v516, %v599
    %v601 = vpop.f32.mrf.mxu0
    %v602 = vpop.f32.mrf.mxu0
    %v603 = vpop.f32.mrf.mxu0
    %604 = vdwg.mxu0
    %v605 = vmax.f32 %v600, 0.0
    %v606 = vpack.c.bf16 %v605, %v605
    %s607 = scalar_lea.vmem [#allocation3], 320
    %v608 = vld [vmem:[%s607] sm:$0xf]
    %v609 = vld [vmem:[%s607 + $0x4] sm:$0xf]
    %v610 = vld [vmem:[%s607 + $0x8] sm:$0xf]
    %v611 = vld [vmem:[%s607 + $0xc] sm:$0xf]
    %v612 = vld [vmem:[%s607 + $0x10] sm:$0xf]
    %v613 = vld [vmem:[%s607 + $0x14] sm:$0xf]
    %v614 = vld [vmem:[%s607 + $0x18] sm:$0xf]
    %v615 = vld [vmem:[%s607 + $0x1c] sm:$0xf]
    %v616 = vld [vmem:[%s607 + $0x20] sm:$0xf]
    %v617 = vld [vmem:[%s607 + $0x24] sm:$0xf]
    %v618 = vld [vmem:[%s607 + $0x28] sm:$0xf]
    %v619 = vld [vmem:[%s607 + $0x2c] sm:$0xf]
    %v620 = vld [vmem:[%s607 + $0x30] sm:$0xf]
    %v621 = vld [vmem:[%s607 + $0x34] sm:$0xf]
    %v622 = vld [vmem:[%s607 + $0x38] sm:$0xf]
    %v623 = vld [vmem:[%s607 + $0x3c] sm:$0xf]
    %v624 = vld [vmem:[#allocation5 + $0x5] sm:$0x1]
    %v625 = vlaneseq
    %v626 = vshrl.u32 %v625, 7
    %v627 = vsub.s32 0, %v626
    %v628 = vrot.slane %v624, %v627
    %v645 = vunpack.c.l.b16 %v608
    %v646 = vunpack.c.l.b16 %v609
    %v647 = vunpack.c.l.b16 %v610
    %v648 = vunpack.c.l.b16 %v611
    %v649 = vunpack.c.l.b16 %v612
    %v650 = vunpack.c.l.b16 %v613
    %v651 = vunpack.c.l.b16 %v614
    %v652 = vunpack.c.l.b16 %v615
    %v653 = vunpack.c.l.b16 %v616
    %v654 = vunpack.c.l.b16 %v617
    %v655 = vunpack.c.l.b16 %v618
    %v656 = vunpack.c.l.b16 %v619
    %v657 = vunpack.c.l.b16 %v620
    %v658 = vunpack.c.l.b16 %v621
    %v659 = vunpack.c.l.b16 %v622
    %v660 = vunpack.c.l.b16 %v623
    %v661 = vpack.c.b16 %v646, %v645
    %v662 = vpack.c.b16 %v648, %v647
    %v663 = vpack.c.b16 %v650, %v649
    %v664 = vpack.c.b16 %v652, %v651
    %v665 = vpack.c.b16 %v654, %v653
    %v666 = vpack.c.b16 %v656, %v655
    %v667 = vpack.c.b16 %v658, %v657
    %v668 = vpack.c.b16 %v660, %v659
    %677 = vmatprep.subr.bf16.mxu0 0
    %678 = vmatpush1.bf16.msra.mxu0 %v668
    %679 = vmatprep.subr.bf16.mxu0 0
    %680 = vmatpush1.bf16.msra.mxu0 %v667
    %681 = vmatprep.subr.bf16.mxu0 0
    %682 = vmatpush1.bf16.msra.mxu0 %v666
    %683 = vmatprep.subr.bf16.mxu0 0
    %684 = vmatpush1.bf16.msra.mxu0 %v665
    %685 = vmatprep.subr.bf16.mxu0 0
    %686 = vmatpush1.bf16.msra.mxu0 %v664
    %687 = vmatprep.subr.bf16.mxu0 0
    %688 = vmatpush1.bf16.msra.mxu0 %v663
    %689 = vmatprep.subr.bf16.mxu0 0
    %690 = vmatpush1.bf16.msra.mxu0 %v662
    %691 = vmatprep.subr.bf16.mxu0 0
    %692 = vmatpush1.bf16.msra.mxu0 %v661
    %693 = vmatprep.subr.bf16.mxu0 0
    %694 = vmatpush2.bf16.msra.mxu0 0
    %695 = vmatprep.subr.bf16.mxu0 0
    %696 = vmatpush2.bf16.msra.mxu0 0
    %697 = vmatprep.subr.bf16.mxu0 0
    %698 = vmatpush2.bf16.msra.mxu0 0
    %699 = vmatprep.subr.bf16.mxu0 0
    %700 = vmatpush2.bf16.msra.mxu0 0
    %701 = vmatprep.subr.bf16.mxu0 0
    %702 = vmatpush2.bf16.msra.mxu0 0
    %703 = vmatprep.subr.bf16.mxu0 0
    %704 = vmatpush2.bf16.msra.mxu0 0
    %705 = vmatprep.subr.bf16.mxu0 0
    %706 = vmatpush2.bf16.msra.mxu0 0
    %707 = vmatprep.subr.bf16.mxu0 0
    %708 = vmatpush2.bf16.msra.mxu0 0
    %709 = vmatprep.mubr.bf16.mxu0 0
    %710 = vmatmul.mubr.bf16.gmra.mxu0 %v606
    %v711 = vpop.f32.mrf.mxu0
    %v712 = vadd.f32 %v628, %v711
    %v713 = vpop.f32.mrf.mxu0
    %v714 = vpop.f32.mrf.mxu0
    %v715 = vpop.f32.mrf.mxu0
    %716 = vdwg.mxu0
    %v717 = vmax.f32 %v712, 0.0
    %v718 = vpack.c.bf16 %v717, %v717
    %s719 = scalar_lea.vmem [#allocation3], 384
    %v720 = vld [vmem:[%s719] sm:$0xf]
    %v721 = vld [vmem:[%s719 + $0x4] sm:$0xf]
    %v722 = vld [vmem:[%s719 + $0x8] sm:$0xf]
    %v723 = vld [vmem:[%s719 + $0xc] sm:$0xf]
    %v724 = vld [vmem:[%s719 + $0x10] sm:$0xf]
    %v725 = vld [vmem:[%s719 + $0x14] sm:$0xf]
    %v726 = vld [vmem:[%s719 + $0x18] sm:$0xf]
    %v727 = vld [vmem:[%s719 + $0x1c] sm:$0xf]
    %v728 = vld [vmem:[%s719 + $0x20] sm:$0xf]
    %v729 = vld [vmem:[%s719 + $0x24] sm:$0xf]
    %v730 = vld [vmem:[%s719 + $0x28] sm:$0xf]
    %v731 = vld [vmem:[%s719 + $0x2c] sm:$0xf]
    %v732 = vld [vmem:[%s719 + $0x30] sm:$0xf]
    %v733 = vld [vmem:[%s719 + $0x34] sm:$0xf]
    %v734 = vld [vmem:[%s719 + $0x38] sm:$0xf]
    %v735 = vld [vmem:[%s719 + $0x3c] sm:$0xf]
    %v736 = vld [vmem:[#allocation5 + $0x6] sm:$0x1]
    %v737 = vlaneseq
    %v738 = vshrl.u32 %v737, 7
    %v739 = vsub.s32 0, %v738
    %v740 = vrot.slane %v736, %v739
    %v757 = vunpack.c.l.b16 %v720
    %v758 = vunpack.c.l.b16 %v721
    %v759 = vunpack.c.l.b16 %v722
    %v760 = vunpack.c.l.b16 %v723
    %v761 = vunpack.c.l.b16 %v724
    %v762 = vunpack.c.l.b16 %v725
    %v763 = vunpack.c.l.b16 %v726
    %v764 = vunpack.c.l.b16 %v727
    %v765 = vunpack.c.l.b16 %v728
    %v766 = vunpack.c.l.b16 %v729
    %v767 = vunpack.c.l.b16 %v730
    %v768 = vunpack.c.l.b16 %v731
    %v769 = vunpack.c.l.b16 %v732
    %v770 = vunpack.c.l.b16 %v733
    %v771 = vunpack.c.l.b16 %v734
    %v772 = vunpack.c.l.b16 %v735
    %v773 = vpack.c.b16 %v758, %v757
    %v774 = vpack.c.b16 %v760, %v759
    %v775 = vpack.c.b16 %v762, %v761
    %v776 = vpack.c.b16 %v764, %v763
    %v777 = vpack.c.b16 %v766, %v765
    %v778 = vpack.c.b16 %v768, %v767
    %v779 = vpack.c.b16 %v770, %v769
    %v780 = vpack.c.b16 %v772, %v771
    %789 = vmatprep.subr.bf16.mxu0 0
    %790 = vmatpush1.bf16.msra.mxu0 %v780
    %791 = vmatprep.subr.bf16.mxu0 0
    %792 = vmatpush1.bf16.msra.mxu0 %v779
    %793 = vmatprep.subr.bf16.mxu0 0
    %794 = vmatpush1.bf16.msra.mxu0 %v778
    %795 = vmatprep.subr.bf16.mxu0 0
    %796 = vmatpush1.bf16.msra.mxu0 %v777
    %797 = vmatprep.subr.bf16.mxu0 0
    %798 = vmatpush1.bf16.msra.mxu0 %v776
    %799 = vmatprep.subr.bf16.mxu0 0
    %800 = vmatpush1.bf16.msra.mxu0 %v775
    %801 = vmatprep.subr.bf16.mxu0 0
    %802 = vmatpush1.bf16.msra.mxu0 %v774
    %803 = vmatprep.subr.bf16.mxu0 0
    %804 = vmatpush1.bf16.msra.mxu0 %v773
    %805 = vmatprep.subr.bf16.mxu0 0
    %806 = vmatpush2.bf16.msra.mxu0 0
    %807 = vmatprep.subr.bf16.mxu0 0
    %808 = vmatpush2.bf16.msra.mxu0 0
    %809 = vmatprep.subr.bf16.mxu0 0
    %810 = vmatpush2.bf16.msra.mxu0 0
    %811 = vmatprep.subr.bf16.mxu0 0
    %812 = vmatpush2.bf16.msra.mxu0 0
    %813 = vmatprep.subr.bf16.mxu0 0
    %814 = vmatpush2.bf16.msra.mxu0 0
    %815 = vmatprep.subr.bf16.mxu0 0
    %816 = vmatpush2.bf16.msra.mxu0 0
    %817 = vmatprep.subr.bf16.mxu0 0
    %818 = vmatpush2.bf16.msra.mxu0 0
    %819 = vmatprep.subr.bf16.mxu0 0
    %820 = vmatpush2.bf16.msra.mxu0 0
    %821 = vmatprep.mubr.bf16.mxu0 0
    %822 = vmatmul.mubr.bf16.gmra.mxu0 %v718
    %v823 = vpop.f32.mrf.mxu0
    %v824 = vadd.f32 %v740, %v823
    %v825 = vpop.f32.mrf.mxu0
    %v826 = vpop.f32.mrf.mxu0
    %v827 = vpop.f32.mrf.mxu0
    %828 = vdwg.mxu0
    %v829 = vmax.f32 %v824, 0.0
    %v830 = vpack.c.bf16 %v829, %v829
    %s831 = scalar_lea.vmem [#allocation3], 448
    %v832 = vld [vmem:[%s831] sm:$0xf]
    %v833 = vld [vmem:[%s831 + $0x4] sm:$0xf]
    %v834 = vld [vmem:[%s831 + $0x8] sm:$0xf]
    %v835 = vld [vmem:[%s831 + $0xc] sm:$0xf]
    %v836 = vld [vmem:[%s831 + $0x10] sm:$0xf]
    %v837 = vld [vmem:[%s831 + $0x14] sm:$0xf]
    %v838 = vld [vmem:[%s831 + $0x18] sm:$0xf]
    %v839 = vld [vmem:[%s831 + $0x1c] sm:$0xf]
    %v840 = vld [vmem:[%s831 + $0x20] sm:$0xf]
    %v841 = vld [vmem:[%s831 + $0x24] sm:$0xf]
    %v842 = vld [vmem:[%s831 + $0x28] sm:$0xf]
    %v843 = vld [vmem:[%s831 + $0x2c] sm:$0xf]
    %v844 = vld [vmem:[%s831 + $0x30] sm:$0xf]
    %v845 = vld [vmem:[%s831 + $0x34] sm:$0xf]
    %v846 = vld [vmem:[%s831 + $0x38] sm:$0xf]
    %v847 = vld [vmem:[%s831 + $0x3c] sm:$0xf]
    %v848 = vld [vmem:[#allocation5 + $0x7] sm:$0x1]
    %v849 = vlaneseq
    %v850 = vshrl.u32 %v849, 7
    %v851 = vsub.s32 0, %v850
    %v852 = vrot.slane %v848, %v851
    %v869 = vunpack.c.l.b16 %v832
    %v870 = vunpack.c.l.b16 %v833
    %v871 = vunpack.c.l.b16 %v834
    %v872 = vunpack.c.l.b16 %v835
    %v873 = vunpack.c.l.b16 %v836
    %v874 = vunpack.c.l.b16 %v837
    %v875 = vunpack.c.l.b16 %v838
    %v876 = vunpack.c.l.b16 %v839
    %v877 = vunpack.c.l.b16 %v840
    %v878 = vunpack.c.l.b16 %v841
    %v879 = vunpack.c.l.b16 %v842
    %v880 = vunpack.c.l.b16 %v843
    %v881 = vunpack.c.l.b16 %v844
    %v882 = vunpack.c.l.b16 %v845
    %v883 = vunpack.c.l.b16 %v846
    %v884 = vunpack.c.l.b16 %v847
    %v885 = vpack.c.b16 %v870, %v869
    %v886 = vpack.c.b16 %v872, %v871
    %v887 = vpack.c.b16 %v874, %v873
    %v888 = vpack.c.b16 %v876, %v875
    %v889 = vpack.c.b16 %v878, %v877
    %v890 = vpack.c.b16 %v880, %v879
    %v891 = vpack.c.b16 %v882, %v881
    %v892 = vpack.c.b16 %v884, %v883
    %901 = vmatprep.subr.bf16.mxu0 0
    %902 = vmatpush1.bf16.msra.mxu0 %v892
    %903 = vmatprep.subr.bf16.mxu0 0
    %904 = vmatpush1.bf16.msra.mxu0 %v891
    %905 = vmatprep.subr.bf16.mxu0 0
    %906 = vmatpush1.bf16.msra.mxu0 %v890
    %907 = vmatprep.subr.bf16.mxu0 0
    %908 = vmatpush1.bf16.msra.mxu0 %v889
    %909 = vmatprep.subr.bf16.mxu0 0
    %910 = vmatpush1.bf16.msra.mxu0 %v888
    %911 = vmatprep.subr.bf16.mxu0 0
    %912 = vmatpush1.bf16.msra.mxu0 %v887
    %913 = vmatprep.subr.bf16.mxu0 0
    %914 = vmatpush1.bf16.msra.mxu0 %v886
    %915 = vmatprep.subr.bf16.mxu0 0
    %916 = vmatpush1.bf16.msra.mxu0 %v885
    %917 = vmatprep.subr.bf16.mxu0 0
    %918 = vmatpush2.bf16.msra.mxu0 0
    %919 = vmatprep.subr.bf16.mxu0 0
    %920 = vmatpush2.bf16.msra.mxu0 0
    %921 = vmatprep.subr.bf16.mxu0 0
    %922 = vmatpush2.bf16.msra.mxu0 0
    %923 = vmatprep.subr.bf16.mxu0 0
    %924 = vmatpush2.bf16.msra.mxu0 0
    %925 = vmatprep.subr.bf16.mxu0 0
    %926 = vmatpush2.bf16.msra.mxu0 0
    %927 = vmatprep.subr.bf16.mxu0 0
    %928 = vmatpush2.bf16.msra.mxu0 0
    %929 = vmatprep.subr.bf16.mxu0 0
    %930 = vmatpush2.bf16.msra.mxu0 0
    %931 = vmatprep.subr.bf16.mxu0 0
    %932 = vmatpush2.bf16.msra.mxu0 0
    %933 = vmatprep.mubr.bf16.mxu0 0
    %934 = vmatmul.mubr.bf16.gmra.mxu0 %v830
    %v935 = vpop.f32.mrf.mxu0
    %v936 = vadd.f32 %v852, %v935
    %v937 = vpop.f32.mrf.mxu0
    %v938 = vpop.f32.mrf.mxu0
    %v939 = vpop.f32.mrf.mxu0
    %940 = vdwg.mxu0
    %v941 = vmax.f32 %v936, 0.0
    %v942 = vpack.c.bf16 %v941, %v941
    %s943 = scalar_lea.vmem [#allocation3], 512
    %v944 = vld [vmem:[%s943] sm:$0xf]
    %v945 = vld [vmem:[%s943 + $0x4] sm:$0xf]
    %v946 = vld [vmem:[%s943 + $0x8] sm:$0xf]
    %v947 = vld [vmem:[%s943 + $0xc] sm:$0xf]
    %v948 = vld [vmem:[%s943 + $0x10] sm:$0xf]
    %v949 = vld [vmem:[%s943 + $0x14] sm:$0xf]
    %v950 = vld [vmem:[%s943 + $0x18] sm:$0xf]
    %v951 = vld [vmem:[%s943 + $0x1c] sm:$0xf]
    %v952 = vld [vmem:[%s943 + $0x20] sm:$0xf]
    %v953 = vld [vmem:[%s943 + $0x24] sm:$0xf]
    %v954 = vld [vmem:[%s943 + $0x28] sm:$0xf]
    %v955 = vld [vmem:[%s943 + $0x2c] sm:$0xf]
    %v956 = vld [vmem:[%s943 + $0x30] sm:$0xf]
    %v957 = vld [vmem:[%s943 + $0x34] sm:$0xf]
    %v958 = vld [vmem:[%s943 + $0x38] sm:$0xf]
    %v959 = vld [vmem:[%s943 + $0x3c] sm:$0xf]
    %v960 = vld [vmem:[#allocation5 + $0x8] sm:$0x1]
    %v961 = vlaneseq
    %v962 = vshrl.u32 %v961, 7
    %v963 = vsub.s32 0, %v962
    %v964 = vrot.slane %v960, %v963
    %v981 = vunpack.c.l.b16 %v944
    %v982 = vunpack.c.l.b16 %v945
    %v983 = vunpack.c.l.b16 %v946
    %v984 = vunpack.c.l.b16 %v947
    %v985 = vunpack.c.l.b16 %v948
    %v986 = vunpack.c.l.b16 %v949
    %v987 = vunpack.c.l.b16 %v950
    %v988 = vunpack.c.l.b16 %v951
    %v989 = vunpack.c.l.b16 %v952
    %v990 = vunpack.c.l.b16 %v953
    %v991 = vunpack.c.l.b16 %v954
    %v992 = vunpack.c.l.b16 %v955
    %v993 = vunpack.c.l.b16 %v956
    %v994 = vunpack.c.l.b16 %v957
    %v995 = vunpack.c.l.b16 %v958
    %v996 = vunpack.c.l.b16 %v959
    %v997 = vpack.c.b16 %v982, %v981
    %v998 = vpack.c.b16 %v984, %v983
    %v999 = vpack.c.b16 %v986, %v985
    %v1000 = vpack.c.b16 %v988, %v987
    %v1001 = vpack.c.b16 %v990, %v989
    %v1002 = vpack.c.b16 %v992, %v991
    %v1003 = vpack.c.b16 %v994, %v993
    %v1004 = vpack.c.b16 %v996, %v995
    %1013 = vmatprep.subr.bf16.mxu0 0
    %1014 = vmatpush1.bf16.msra.mxu0 %v1004
    %1015 = vmatprep.subr.bf16.mxu0 0
    %1016 = vmatpush1.bf16.msra.mxu0 %v1003
    %1017 = vmatprep.subr.bf16.mxu0 0
    %1018 = vmatpush1.bf16.msra.mxu0 %v1002
    %1019 = vmatprep.subr.bf16.mxu0 0
    %1020 = vmatpush1.bf16.msra.mxu0 %v1001
    %1021 = vmatprep.subr.bf16.mxu0 0
    %1022 = vmatpush1.bf16.msra.mxu0 %v1000
    %1023 = vmatprep.subr.bf16.mxu0 0
    %1024 = vmatpush1.bf16.msra.mxu0 %v999
    %1025 = vmatprep.subr.bf16.mxu0 0
    %1026 = vmatpush1.bf16.msra.mxu0 %v998
    %1027 = vmatprep.subr.bf16.mxu0 0
    %1028 = vmatpush1.bf16.msra.mxu0 %v997
    %1029 = vmatprep.subr.bf16.mxu0 0
    %1030 = vmatpush2.bf16.msra.mxu0 0
    %1031 = vmatprep.subr.bf16.mxu0 0
    %1032 = vmatpush2.bf16.msra.mxu0 0
    %1033 = vmatprep.subr.bf16.mxu0 0
    %1034 = vmatpush2.bf16.msra.mxu0 0
    %1035 = vmatprep.subr.bf16.mxu0 0
    %1036 = vmatpush2.bf16.msra.mxu0 0
    %1037 = vmatprep.subr.bf16.mxu0 0
    %1038 = vmatpush2.bf16.msra.mxu0 0
    %1039 = vmatprep.subr.bf16.mxu0 0
    %1040 = vmatpush2.bf16.msra.mxu0 0
    %1041 = vmatprep.subr.bf16.mxu0 0
    %1042 = vmatpush2.bf16.msra.mxu0 0
    %1043 = vmatprep.subr.bf16.mxu0 0
    %1044 = vmatpush2.bf16.msra.mxu0 0
    %1045 = vmatprep.mubr.bf16.mxu0 0
    %1046 = vmatmul.mubr.bf16.gmra.mxu0 %v942
    %v1047 = vpop.f32.mrf.mxu0
    %v1048 = vadd.f32 %v964, %v1047
    %v1049 = vpop.f32.mrf.mxu0
    %v1050 = vpop.f32.mrf.mxu0
    %v1051 = vpop.f32.mrf.mxu0
    %1052 = vdwg.mxu0
    %v1053 = vmax.f32 %v1048, 0.0
    %v1054 = vpack.c.bf16 %v1053, %v1053
    %s1055 = scalar_lea.vmem [#allocation3], 576
    %v1056 = vld [vmem:[%s1055] sm:$0xf]
    %v1057 = vld [vmem:[%s1055 + $0x4] sm:$0xf]
    %v1058 = vld [vmem:[%s1055 + $0x8] sm:$0xf]
    %v1059 = vld [vmem:[%s1055 + $0xc] sm:$0xf]
    %v1060 = vld [vmem:[%s1055 + $0x10] sm:$0xf]
    %v1061 = vld [vmem:[%s1055 + $0x14] sm:$0xf]
    %v1062 = vld [vmem:[%s1055 + $0x18] sm:$0xf]
    %v1063 = vld [vmem:[%s1055 + $0x1c] sm:$0xf]
    %v1064 = vld [vmem:[%s1055 + $0x20] sm:$0xf]
    %v1065 = vld [vmem:[%s1055 + $0x24] sm:$0xf]
    %v1066 = vld [vmem:[%s1055 + $0x28] sm:$0xf]
    %v1067 = vld [vmem:[%s1055 + $0x2c] sm:$0xf]
    %v1068 = vld [vmem:[%s1055 + $0x30] sm:$0xf]
    %v1069 = vld [vmem:[%s1055 + $0x34] sm:$0xf]
    %v1070 = vld [vmem:[%s1055 + $0x38] sm:$0xf]
    %v1071 = vld [vmem:[%s1055 + $0x3c] sm:$0xf]
    %v1072 = vld [vmem:[#allocation5 + $0x9] sm:$0x1]
    %v1073 = vlaneseq
    %v1074 = vshrl.u32 %v1073, 7
    %v1075 = vsub.s32 0, %v1074
    %v1076 = vrot.slane %v1072, %v1075
    %v1093 = vunpack.c.l.b16 %v1056
    %v1094 = vunpack.c.l.b16 %v1057
    %v1095 = vunpack.c.l.b16 %v1058
    %v1096 = vunpack.c.l.b16 %v1059
    %v1097 = vunpack.c.l.b16 %v1060
    %v1098 = vunpack.c.l.b16 %v1061
    %v1099 = vunpack.c.l.b16 %v1062
    %v1100 = vunpack.c.l.b16 %v1063
    %v1101 = vunpack.c.l.b16 %v1064
    %v1102 = vunpack.c.l.b16 %v1065
    %v1103 = vunpack.c.l.b16 %v1066
    %v1104 = vunpack.c.l.b16 %v1067
    %v1105 = vunpack.c.l.b16 %v1068
    %v1106 = vunpack.c.l.b16 %v1069
    %v1107 = vunpack.c.l.b16 %v1070
    %v1108 = vunpack.c.l.b16 %v1071
    %v1109 = vpack.c.b16 %v1094, %v1093
    %v1110 = vpack.c.b16 %v1096, %v1095
    %v1111 = vpack.c.b16 %v1098, %v1097
    %v1112 = vpack.c.b16 %v1100, %v1099
    %v1113 = vpack.c.b16 %v1102, %v1101
    %v1114 = vpack.c.b16 %v1104, %v1103
    %v1115 = vpack.c.b16 %v1106, %v1105
    %v1116 = vpack.c.b16 %v1108, %v1107
    %1125 = vmatprep.subr.bf16.mxu0 0
    %1126 = vmatpush1.bf16.msra.mxu0 %v1116
    %1127 = vmatprep.subr.bf16.mxu0 0
    %1128 = vmatpush1.bf16.msra.mxu0 %v1115
    %1129 = vmatprep.subr.bf16.mxu0 0
    %1130 = vmatpush1.bf16.msra.mxu0 %v1114
    %1131 = vmatprep.subr.bf16.mxu0 0
    %1132 = vmatpush1.bf16.msra.mxu0 %v1113
    %1133 = vmatprep.subr.bf16.mxu0 0
    %1134 = vmatpush1.bf16.msra.mxu0 %v1112
    %1135 = vmatprep.subr.bf16.mxu0 0
    %1136 = vmatpush1.bf16.msra.mxu0 %v1111
    %1137 = vmatprep.subr.bf16.mxu0 0
    %1138 = vmatpush1.bf16.msra.mxu0 %v1110
    %1139 = vmatprep.subr.bf16.mxu0 0
    %1140 = vmatpush1.bf16.msra.mxu0 %v1109
    %1141 = vmatprep.subr.bf16.mxu0 0
    %1142 = vmatpush2.bf16.msra.mxu0 0
    %1143 = vmatprep.subr.bf16.mxu0 0
    %1144 = vmatpush2.bf16.msra.mxu0 0
    %1145 = vmatprep.subr.bf16.mxu0 0
    %1146 = vmatpush2.bf16.msra.mxu0 0
    %1147 = vmatprep.subr.bf16.mxu0 0
    %1148 = vmatpush2.bf16.msra.mxu0 0
    %1149 = vmatprep.subr.bf16.mxu0 0
    %1150 = vmatpush2.bf16.msra.mxu0 0
    %1151 = vmatprep.subr.bf16.mxu0 0
    %1152 = vmatpush2.bf16.msra.mxu0 0
    %1153 = vmatprep.subr.bf16.mxu0 0
    %1154 = vmatpush2.bf16.msra.mxu0 0
    %1155 = vmatprep.subr.bf16.mxu0 0
    %1156 = vmatpush2.bf16.msra.mxu0 0
    %1157 = vmatprep.mubr.bf16.mxu0 0
    %1158 = vmatmul.mubr.bf16.gmra.mxu0 %v1054
    %v1159 = vpop.f32.mrf.mxu0
    %v1160 = vadd.f32 %v1076, %v1159
    %v1161 = vpop.f32.mrf.mxu0
    %v1162 = vpop.f32.mrf.mxu0
    %v1163 = vpop.f32.mrf.mxu0
    %1164 = vdwg.mxu0
    %vm1165 = vcmask 31744
    %1166 = vst.msk [vmem:[%s3] sm:$0xff] %vm1165, %v1160
    // Predicated region
    $region22: #{_forward_impl.1} parent=1 // pred_check
      _
    $region23: #{_forward_impl.1} parent=1 // pred_check_branch
      %1168 = sbr.rel (0) target = $region25
    $region24: #{_forward_impl.1} parent=1 // pred_region
      _
    $region25: #{_forward_impl.1} parent=1 // pred_fallthru
      _
    // Predicated region
    $region26: #{_forward_impl.1} parent=1 // pred_check
      _
    $region27: #{_forward_impl.1} parent=1 // pred_check_branch
      %1170 = sbr.rel (0) target = $region29
    $region28: #{_forward_impl.1} parent=1 // pred_region
      _
    $region29: #{_forward_impl.1} parent=1 // pred_fallthru
      _
    %1171 = vsyncpa [#allocation4], 1
    %1172 = vsyncpa [#allocation6], 1

</llo_original>
